<compile_context>
chip_gen: v5e
topology: v5e:2x2
jax: 0.10.0
libtpu: 0.0.40
codegen_flags: <defaults>
</compile_context>

<pallas_src>
import jax
import jax.numpy as jnp
from jax.experimental import pallas as pl
from jax.experimental.pallas import tpu as pltpu


def _round_up(x, n):
    return ((x + n - 1) // n) * n


# ----------------------------- kernels ------------------------------------


def _kernel_sep(x1_ref, x2_ref, w1_ref, w2_ref, o_ref):
    # x1: [tm, D1], x2: [tm, D2], w1: [D1, P], w2: [D2, P], o: [1, tm]
    p1 = jnp.dot(x1_ref[...], w1_ref[...], preferred_element_type=jnp.float32)
    p2 = jnp.dot(x2_ref[...], w2_ref[...], preferred_element_type=jnp.float32)
    s = jnp.sum(p1 * p2, axis=-1)
    o_ref[...] = s.reshape(1, -1).astype(o_ref.dtype)


def _kernel_shared(x1_ref, x2_ref, w_ref, o_ref):
    # reuse_weight=True: single weight input, one DMA stream / one VMEM slab.
    p1 = jnp.dot(x1_ref[...], w_ref[...], preferred_element_type=jnp.float32)
    p2 = jnp.dot(x2_ref[...], w_ref[...], preferred_element_type=jnp.float32)
    s = jnp.sum(p1 * p2, axis=-1)
    o_ref[...] = s.reshape(1, -1).astype(o_ref.dtype)


def _kernel_sep_ptiled(x1_ref, x2_ref, w1_ref, w2_ref, o_ref, acc_ref):
    # Projection axis tiled: accumulate partial sums in f32 VMEM scratch.
    pj = pl.program_id(1)

    @pl.when(pj == 0)
    def _init():
        acc_ref[...] = jnp.zeros_like(acc_ref)

    p1 = jnp.dot(x1_ref[...], w1_ref[...], preferred_element_type=jnp.float32)
    p2 = jnp.dot(x2_ref[...], w2_ref[...], preferred_element_type=jnp.float32)
    acc_ref[...] += jnp.sum(p1 * p2, axis=-1).reshape(1, -1)

    @pl.when(pj == pl.num_programs(1) - 1)
    def _finalize():
        o_ref[...] = acc_ref[...].astype(o_ref.dtype)


def _kernel_shared_ptiled(x1_ref, x2_ref, w_ref, o_ref, acc_ref):
    pj = pl.program_id(1)

    @pl.when(pj == 0)
    def _init():
        acc_ref[...] = jnp.zeros_like(acc_ref)

    p1 = jnp.dot(x1_ref[...], w_ref[...], preferred_element_type=jnp.float32)
    p2 = jnp.dot(x2_ref[...], w_ref[...], preferred_element_type=jnp.float32)
    acc_ref[...] += jnp.sum(p1 * p2, axis=-1).reshape(1, -1)

    @pl.when(pj == pl.num_programs(1) - 1)
    def _finalize():
        o_ref[...] = acc_ref[...].astype(o_ref.dtype)


# --------------------------- sizing helpers --------------------------------


def _vmem_numbers():
    """Generation-aware (capacity, vmem_limit_bytes, tile_budget_bytes)."""
    cap = 128 * 1024 * 1024
    try:
        info = pltpu.get_tpu_info()
        cap = int(getattr(info, "vmem_capacity_bytes", cap)) or cap
    except Exception:
        pass
    # Leave headroom for Mosaic internal scratch and the pipeline machinery:
    # 96 MiB limit on 128 MiB parts (v5e/v6e), 48 MiB on v7x's 64 MiB.
    limit = (cap * 3) // 4
    # What our own tiles may consume: 64 MiB on 128 MiB parts, 24 MiB on v7x.
    budget = cap // 2 if cap >= 96 * 1024 * 1024 else (3 * cap) // 8
    return cap, int(limit), int(budget)


_TM_CANDIDATES = (8192, 4096, 2048, 1024, 512, 256, 128)


def _choose_tiles(m, d1, d2, p, in_isz, w_isz, out_isz, shared_w, budget):
    """Pick (tm, tp). tp == p means the projection axis is NOT tiled."""
    w_rows = d1 if shared_w else (d1 + d2)

    def footprint(tm, tp):
        f = 2 * tm * (d1 + d2) * in_isz      # x1/x2 tiles, double-buffered
        f += w_rows * tp * w_isz             # resident (single-buffered) weights
        f += 2 * tm * tp * 4                 # f32 p1/p2 intermediates
        f += 2 * tm * out_isz                # output block, double-buffered
        f += tm * 4                          # f32 accumulator scratch
        return f

    if m < 128:
        tm_cap = m
        cands = (m,)
    else:
        tm_cap = max(128, (m // 128) * 128)  # keep blocks <= array extent
        cands = tuple(t for t in _TM_CANDIDATES if t <= tm_cap) or (128,)

    # Preferred: no P tiling, biggest M tile that fits the budget.
    for tm in cands:
        if footprint(tm, p) <= budget:
            return tm, p

    # Large P: tile the projection axis, keeping a reasonable M tile.
    for tm in (512, 256, 128):
        tm = min(tm, tm_cap)
        fixed = 2 * tm * (d1 + d2) * in_isz + 2 * tm * out_isz + tm * 4
        avail = budget - fixed
        if avail <= 0:
            continue
        per_col = w_rows * w_isz + 2 * tm * 4
        tp = (avail // per_col) // 128 * 128
        if tp >= 128:
            return tm, int(min(tp, _round_up(p, 128)))

    # Last resort: smallest tiles (may spill, but compiles).
    return min(128, tm_cap), 128


# ------------------------------- wrapper ------------------------------------


def projected_dot_product_similarity(tensor_1, tensor_2, w1, w2=None,
                                     bias=None, activation=None,
                                     reuse_weight=False,
                                     min_rows_for_pallas=2048,
                                     _tiles=None):
    """JAX/Pallas equivalent of ProjectedDotProductSimilarity.forward."""
    if reuse_weight:
        if tensor_1.shape[-1] != tensor_2.shape[-1]:
            raise ValueError("if reuse_weight=True, tensor_1_dim must equal tensor_2_dim")
        w2 = w1
    else:
        assert w2 is not None, "w2 required when reuse_weight=False"

    lead_shape = tensor_1.shape[:-1]
    d1 = tensor_1.shape[-1]
    d2 = tensor_2.shape[-1]
    p = w1.shape[-1]

    x1 = tensor_1.reshape(-1, d1)
    x2 = tensor_2.reshape(-1, d2)
    m = x1.shape[0]

    def _epilogue(res):
        if bias is not None:
            res = res + bias
        if activation is not None:
            res = activation(res)
        return res

    # Tiny problems: kernel launch + per-step overhead dominates; XLA's fused
    # einsum is strictly faster there.
    if m < min_rows_for_pallas and _tiles is None and min_rows_for_pallas > 0:
        res = ((x1 @ w1) * (x2 @ w2)).sum(-1).astype(tensor_1.dtype)
        return _epilogue(res.reshape(lead_shape))

    in_isz = jnp.dtype(tensor_1.dtype).itemsize
    w_isz = jnp.dtype(w1.dtype).itemsize
    out_isz = in_isz

    _, vmem_limit, budget = _vmem_numbers()
    if _tiles is not None:
        tm, tp = _tiles  # debug/test override
    else:
        tm, tp = _choose_tiles(m, d1, d2, p, in_isz, w_isz, out_isz,
                               reuse_weight, budget)

    p_tiled = (tp != p)
    w1k, w2k = w1, w2
    if p_tiled:
        p_pad = _round_up(p, tp)
        if p_pad != p:
            # Zero-pad the projection axis so ragged P tiles never feed garbage
            # into the reduction (zero columns contribute exactly zero).
            w1k = jnp.pad(w1, ((0, 0), (0, p_pad - p)))
            if not reuse_weight:
                w2k = jnp.pad(w2, ((0, 0), (0, p_pad - p)))
        num_p = p_pad // tp
    else:
        num_p = 1

    num_m = pl.cdiv(m, tm)

    def build_call(single_buffer_weights):
        def wspec(shape, imap):
            if single_buffer_weights:
                # Weights are never re-fetched (constant index_map); a second
                # pipeline buffer would be pure wasted VMEM.
                return pl.BlockSpec(shape, imap, pipeline_mode=pl.Buffered(1))
            return pl.BlockSpec(shape, imap)

        if p_tiled:
            grid = (num_m, num_p)
            x1_spec = pl.BlockSpec((tm, d1), lambda i, j: (i, 0))
            x2_spec = pl.BlockSpec((tm, d2), lambda i, j: (i, 0))
            out_spec = pl.BlockSpec((1, tm), lambda i, j: (0, i))
            w1_spec = wspec((d1, tp), lambda i, j: (0, j))
            scratch = [pltpu.VMEM((1, tm), jnp.float32)]
            sem = ("parallel", "arbitrary")
            if reuse_weight:
                kernel = _kernel_shared_ptiled
                in_specs = [x1_spec, x2_spec, w1_spec]
                operands = (x1, x2, w1k)
            else:
                w2_spec = wspec((d2, tp), lambda i, j: (0, j))
                kernel = _kernel_sep_ptiled
                in_specs = [x1_spec, x2_spec, w1_spec, w2_spec]
                operands = (x1, x2, w1k, w2k)
        else:
            grid = (num_m,)
            x1_spec = pl.BlockSpec((tm, d1), lambda i: (i, 0))
            x2_spec = pl.BlockSpec((tm, d2), lambda i: (i, 0))
            out_spec = pl.BlockSpec((1, tm), lambda i: (0, i))
            w1_spec = wspec((d1, p), lambda i: (0, 0))
            scratch = []
            sem = ("parallel",)
            if reuse_weight:
                kernel = _kernel_shared
                in_specs = [x1_spec, x2_spec, w1_spec]
                operands = (x1, x2, w1k)
            else:
                w2_spec = wspec((d2, p), lambda i: (0, 0))
                kernel = _kernel_sep
                in_specs = [x1_spec, x2_spec, w1_spec, w2_spec]
                operands = (x1, x2, w1k, w2k)

        call = pl.pallas_call(
            kernel,
            out_shape=jax.ShapeDtypeStruct((1, m), tensor_1.dtype),
            grid_spec=pltpu.PrefetchScalarGridSpec(
                num_scalar_prefetch=0,
                grid=grid,
                in_specs=in_specs,
                out_specs=out_spec,
                scratch_shapes=scratch),
            compiler_params=pltpu.CompilerParams(
                dimension_semantics=sem,
                vmem_limit_bytes=vmem_limit),
        )
        return call, operands

    try:
        call, operands = build_call(single_buffer_weights=True)
        out = call(*operands)
    except Exception:
        # pl.Buffered(1) unsupported on this JAX/Mosaic build: fall back to the
        # default double-buffered weight pipelining (costs VMEM only).
        call, operands = build_call(single_buffer_weights=False)
        out = call(*operands)

    result = out[0, :m].reshape(lead_shape)
    return _epilogue(result)


def xavier_uniform(key, shape, dtype=jnp.float32):
    fan_in, fan_out = shape
    limit = (6.0 / (fan_in + fan_out)) ** 0.5
    return jax.random.uniform(key, shape, dtype=dtype, minval=-limit, maxval=limit)


if __name__ == "__main__":
    # Small shapes: batch=2, seq=96, tensor_1_dim=32, tensor_2_dim=32, projected_dim=16
    # m = 192 rows -> exercises a ragged last M tile (tm=128, grid=2) with no padding.
    batch, seq = 2, 96
    tensor_1_dim, tensor_2_dim, projected_dim = 32, 32, 16

    key = jax.random.PRNGKey(0)
    k1, k2, kw1, kw2, kw3, kw4 = jax.random.split(key, 6)

    tensor_1 = jax.random.normal(k1, (batch, seq, tensor_1_dim), dtype=jnp.float32)
    tensor_2 = jax.random.normal(k2, (batch, seq, tensor_2_dim), dtype=jnp.float32)

    # Deterministic parameter init (mirrors reset_parameters: xavier_uniform).
    w1 = xavier_uniform(kw1, (tensor_1_dim, projected_dim))
    w2 = xavier_uniform(kw2, (tensor_2_dim, projected_dim))

    # --- separate-weight path (min_rows_for_pallas=0 forces the Pallas kernel) ---
    out = projected_dot_product_similarity(tensor_1, tensor_2, w1, w2,
                                            min_rows_for_pallas=0)
    out = jax.block_until_ready(out)
    ref = ((tensor_1 @ w1) * (tensor_2 @ w2)).sum(-1)
    assert out.shape == (batch, seq), out.shape
    assert jnp.allclose(out, ref, atol=1e-4, rtol=1e-4)

    # --- reuse_weight path (shared-weight kernel) ---
    out_rw = projected_dot_product_similarity(tensor_1, tensor_2, w1,
                                              reuse_weight=True,
                                              min_rows_for_pallas=0)
    out_rw = jax.block_until_ready(out_rw)
    ref_rw = ((tensor_1 @ w1) * (tensor_2 @ w1)).sum(-1)
    assert out_rw.shape == (batch, seq), out_rw.shape
    assert jnp.allclose(out_rw, ref_rw, atol=1e-4, rtol=1e-4)

    # --- P-tiled accumulation path (forced small tiles, P=160 not a multiple of 128
    #     so the zero-padded-weight / ragged-P machinery is exercised) ---
    p_big = 160
    w1b = xavier_uniform(kw3, (tensor_1_dim, p_big))
    w2b = xavier_uniform(kw4, (tensor_2_dim, p_big))
    out_pt = projected_dot_product_similarity(tensor_1, tensor_2, w1b, w2b,
                                              min_rows_for_pallas=0,
                                              _tiles=(128, 128))
    out_pt = jax.block_until_ready(out_pt)
    ref_pt = ((tensor_1 @ w1b) * (tensor_2 @ w2b)).sum(-1)
    assert out_pt.shape == (batch, seq), out_pt.shape
    assert jnp.allclose(out_pt, ref_pt, atol=1e-4, rtol=1e-4)

    print("KERNEL_OK")
</pallas_src>

<mosaic_0001>
module attributes {stable_mosaic.version = 11 : i64} {
  func.func @_kernel_sep(%arg0: i32, %arg1: memref<128x32xf32, #tpu.memory_space<vmem>>, %arg2: memref<128x32xf32, #tpu.memory_space<vmem>>, %arg3: memref<32x16xf32, #tpu.memory_space<vmem>>, %arg4: memref<32x16xf32, #tpu.memory_space<vmem>>, %arg5: memref<1x128xf32, #tpu.memory_space<vmem>>) attributes {dimension_semantics = [#tpu.dimension_semantics<parallel>], iteration_bounds = array<i64: 2>, scalar_prefetch = 0 : i64, scratch_operands = 0 : i64, tpu.core_type = #tpu.core_type<tc>, window_params = [{transform_indices = @transform_0, window_bounds = array<i64: 128, 32>}, {transform_indices = @transform_1, window_bounds = array<i64: 128, 32>}, {pipeline_mode = #tpu.pipeline_mode<synchronous>, transform_indices = @transform_2, window_bounds = array<i64: 32, 16>}, {pipeline_mode = #tpu.pipeline_mode<synchronous>, transform_indices = @transform_3, window_bounds = array<i64: 32, 16>}, {transform_indices = @transform_4, window_bounds = array<i64: 1, 128>}]} {
    %c0 = arith.constant 0 : index
    %c0_0 = arith.constant 0 : index
    %0 = vector.load %arg1[%c0, %c0_0] : memref<128x32xf32, #tpu.memory_space<vmem>>, vector<128x32xf32>
    %c0_1 = arith.constant 0 : index
    %c0_2 = arith.constant 0 : index
    %1 = vector.load %arg3[%c0_1, %c0_2] : memref<32x16xf32, #tpu.memory_space<vmem>>, vector<32x16xf32>
    %cst = arith.constant dense<0.000000e+00> : vector<128x16xf32>
    %2 = tpu.matmul %0, %1, %cst {dimension_numbers = #tpu.dot_dimension_numbers<[1], [0], [0], [1], [0, 0, 1, 1], [], []>} : vector<128x32xf32>, vector<32x16xf32>, vector<128x16xf32> -> vector<128x16xf32>
    %c0_3 = arith.constant 0 : index
    %c0_4 = arith.constant 0 : index
    %3 = vector.load %arg2[%c0_3, %c0_4] : memref<128x32xf32, #tpu.memory_space<vmem>>, vector<128x32xf32>
    %c0_5 = arith.constant 0 : index
    %c0_6 = arith.constant 0 : index
    %4 = vector.load %arg4[%c0_5, %c0_6] : memref<32x16xf32, #tpu.memory_space<vmem>>, vector<32x16xf32>
    %cst_7 = arith.constant dense<0.000000e+00> : vector<128x16xf32>
    %5 = tpu.matmul %3, %4, %cst_7 {dimension_numbers = #tpu.dot_dimension_numbers<[1], [0], [0], [1], [0, 0, 1, 1], [], []>} : vector<128x32xf32>, vector<32x16xf32>, vector<128x16xf32> -> vector<128x16xf32>
    %6 = arith.mulf %2, %5 : vector<128x16xf32>
    %cst_8 = arith.constant dense<0.000000e+00> : vector<128xf32>
    %7 = vector.multi_reduction <add>, %6, %cst_8 [1] : vector<128x16xf32> to vector<128xf32>
    %8 = vector.shape_cast %7 : vector<128xf32> to vector<1x128xf32>
    %c0_9 = arith.constant 0 : index
    %c0_10 = arith.constant 0 : index
    %9 = vector.load %arg5[%c0_9, %c0_10] : memref<1x128xf32, #tpu.memory_space<vmem>>, vector<1x128xf32>
    tpu.vector_store %arg5[%c0_9, %c0_10], %8 {strides = array<i32>} : memref<1x128xf32, #tpu.memory_space<vmem>>, vector<1x128xf32>,
    return
  }
  func.func @transform_0(%arg0: i32) -> (i32, i32) {
    %c0_i32 = arith.constant 0 : i32
    %c0_i32_0 = arith.constant 0 : i32
    return %arg0, %c0_i32 : i32, i32
  }
  func.func @transform_1(%arg0: i32) -> (i32, i32) {
    %c0_i32 = arith.constant 0 : i32
    %c0_i32_0 = arith.constant 0 : i32
    return %arg0, %c0_i32 : i32, i32
  }
  func.func @transform_2(%arg0: i32) -> (i32, i32) {
    %c0_i32 = arith.constant 0 : i32
    %c0_i32_0 = arith.constant 0 : i32
    %c0_i32_1 = arith.constant 0 : i32
    return %c0_i32, %c0_i32_0 : i32, i32
  }
  func.func @transform_3(%arg0: i32) -> (i32, i32) {
    %c0_i32 = arith.constant 0 : i32
    %c0_i32_0 = arith.constant 0 : i32
    %c0_i32_1 = arith.constant 0 : i32
    return %c0_i32, %c0_i32_0 : i32, i32
  }
  func.func @transform_4(%arg0: i32) -> (i32, i32) {
    %c0_i32 = arith.constant 0 : i32
    %c0_i32_0 = arith.constant 0 : i32
    return %c0_i32, %arg0 : i32, i32
  }
}

module attributes {stable_mosaic.version = 11 : i64} {
  func.func @_kernel_sep(%arg0: i32, %arg1: memref<128x32xf32, #tpu.memory_space<vmem>>, %arg2: memref<128x32xf32, #tpu.memory_space<vmem>>, %arg3: memref<32x16xf32, #tpu.memory_space<vmem>>, %arg4: memref<32x16xf32, #tpu.memory_space<vmem>>, %arg5: memref<1x128xf32, #tpu.memory_space<vmem>>) attributes {dimension_semantics = [#tpu.dimension_semantics<parallel>], iteration_bounds = array<i64: 2>, scalar_prefetch = 0 : i64, scratch_operands = 0 : i64, tpu.core_type = #tpu.core_type<tc>, window_params = [{transform_indices = @transform_0, window_bounds = array<i64: 128, 32>}, {transform_indices = @transform_1, window_bounds = array<i64: 128, 32>}, {pipeline_mode = #tpu.pipeline_mode<synchronous>, transform_indices = @transform_2, window_bounds = array<i64: 32, 16>}, {pipeline_mode = #tpu.pipeline_mode<synchronous>, transform_indices = @transform_3, window_bounds = array<i64: 32, 16>}, {transform_indices = @transform_4, window_bounds = array<i64: 1, 128>}]} {
    %c0 = arith.constant 0 : index
    %c0_0 = arith.constant 0 : index
    %0 = vector.load %arg1[%c0, %c0_0] : memref<128x32xf32, #tpu.memory_space<vmem>>, vector<128x32xf32>
    %c0_1 = arith.constant 0 : index
    %c0_2 = arith.constant 0 : index
    %1 = vector.load %arg3[%c0_1, %c0_2] : memref<32x16xf32, #tpu.memory_space<vmem>>, vector<32x16xf32>
    %cst = arith.constant dense<0.000000e+00> : vector<128x16xf32>
    %2 = tpu.matmul %0, %1, %cst {dimension_numbers = #tpu.dot_dimension_numbers<[1], [0], [0], [1], [0, 0, 1, 1], [], []>} : vector<128x32xf32>, vector<32x16xf32>, vector<128x16xf32> -> vector<128x16xf32>
    %c0_3 = arith.constant 0 : index
    %c0_4 = arith.constant 0 : index
    %3 = vector.load %arg2[%c0_3, %c0_4] : memref<128x32xf32, #tpu.memory_space<vmem>>, vector<128x32xf32>
    %c0_5 = arith.constant 0 : index
    %c0_6 = arith.constant 0 : index
    %4 = vector.load %arg4[%c0_5, %c0_6] : memref<32x16xf32, #tpu.memory_space<vmem>>, vector<32x16xf32>
    %cst_7 = arith.constant dense<0.000000e+00> : vector<128x16xf32>
    %5 = tpu.matmul %3, %4, %cst_7 {dimension_numbers = #tpu.dot_dimension_numbers<[1], [0], [0], [1], [0, 0, 1, 1], [], []>} : vector<128x32xf32>, vector<32x16xf32>, vector<128x16xf32> -> vector<128x16xf32>
    %6 = arith.mulf %2, %5 : vector<128x16xf32>
    %cst_8 = arith.constant dense<0.000000e+00> : vector<128xf32>
    %7 = vector.multi_reduction <add>, %6, %cst_8 [1] : vector<128x16xf32> to vector<128xf32>
    %8 = vector.shape_cast %7 : vector<128xf32> to vector<1x128xf32>
    %c0_9 = arith.constant 0 : index
    %c0_10 = arith.constant 0 : index
    %9 = vector.load %arg5[%c0_9, %c0_10] : memref<1x128xf32, #tpu.memory_space<vmem>>, vector<1x128xf32>
    tpu.vector_store %arg5[%c0_9, %c0_10], %8 {strides = array<i32>} : memref<1x128xf32, #tpu.memory_space<vmem>>, vector<1x128xf32>,
    return
  }
  func.func @transform_0(%arg0: i32) -> (i32, i32) {
    %c0_i32 = arith.constant 0 : i32
    %c0_i32_0 = arith.constant 0 : i32
    return %arg0, %c0_i32 : i32, i32
  }
  func.func @transform_1(%arg0: i32) -> (i32, i32) {
    %c0_i32 = arith.constant 0 : i32
    %c0_i32_0 = arith.constant 0 : i32
    return %arg0, %c0_i32 : i32, i32
  }
  func.func @transform_2(%arg0: i32) -> (i32, i32) {
    %c0_i32 = arith.constant 0 : i32
    %c0_i32_0 = arith.constant 0 : i32
    %c0_i32_1 = arith.constant 0 : i32
    return %c0_i32, %c0_i32_0 : i32, i32
  }
  func.func @transform_3(%arg0: i32) -> (i32, i32) {
    %c0_i32 = arith.constant 0 : i32
    %c0_i32_0 = arith.constant 0 : i32
    %c0_i32_1 = arith.constant 0 : i32
    return %c0_i32, %c0_i32_0 : i32, i32
  }
  func.func @transform_4(%arg0: i32) -> (i32, i32) {
    %c0_i32 = arith.constant 0 : i32
    %c0_i32_0 = arith.constant 0 : i32
    return %c0_i32, %arg0 : i32, i32
  }
}

</mosaic_0001>

<llo_original>
// kernel: tpu_custom_call.1
$region0: #{tpu_custom_call.1}
  #allocation0 [shape = 'u32[]', space=smem, size = 0x4, offset = 0x4, fixed_abs, tag = 'smem constant byte address 0x4 - core index']
  #allocation1 [shape = 'u32[72,128]{1,0:T(1,128)}', space=vmem, size = 0x9000, scoped, tag = 'internal scratch']
  %s0 = inlined_call_operand.vmem [shape: f32[192,32], index: 0, kind: input, shape index: {}]
  %s1 = inlined_call_operand.vmem [shape: f32[192,32], index: 1, kind: input, shape index: {}]
  %s2 = inlined_call_operand.vmem [shape: f32[32,16], index: 2, kind: input, shape index: {}]
  %s3 = inlined_call_operand.vmem [shape: f32[32,16], index: 3, kind: input, shape index: {}]
  %s4 = inlined_call_operand.hbm [shape: f32[1,192], index: 4, kind: output, shape index: {}]
  %s5 = sld [smem:[#allocation0]]
  $region49: #{tpu_custom_call.1} parent=0
    _
  %s7 = ssub.s32 1, %s5
  %s8 = scalar_select 0, %s7, %s5
  $region1: #{tpu_custom_call.1} parent=0
    #allocation2 [shape = 'u8[1024]{0}', space=vmem, size = 0x400, scoped, tag = 'output window, operand 0']
    #allocation3 [shape = 's32[2]{0}', space=sflag, size = 0x8, scoped, tag = 'scoped memory for tpu_custom_call.1']
    %9 = vsyncpa [#allocation3], 0
    %s10 = scalar_lea.sflag [#allocation3], 1
    %11 = vsyncpa %s10, 0
    loop: start=0, step=1, limit=4
    $region2: #{tpu_custom_call.1} parent=1 // loop_pre_header
      _
    $region3: #{tpu_custom_call.1} parent=1 // loop_header
      %s13 = sphi 0, %s17
      %p14 = scmp.ge.s32.totalorder %s13, 4
      %s23 = sphi 0, %s25
      %s26 = sphi 0, %s23
      %s27 = sphi 0, %s26
      %s43 = sphi 0, %s27
      %s49 = sphi 0, %s51
      %s52 = sphi 0, %s49
      %s53 = sphi 0, %s52
      %s69 = sphi 0, %s53
      %s73 = sphi 0, %s73
      %s75 = sphi 0, %s73
      %s76 = sphi 0, %s75
      %s90 = sphi 0, %s76
      %s94 = sphi 0, %s94
      %s96 = sphi 0, %s94
      %s97 = sphi 0, %s96
      %s111 = sphi 0, %s97
      %s117 = sphi 0, %s119
      %s120 = sphi 0, %s117
      %s121 = sphi 0, %s120
      %s137 = sphi 0, %s121
    $region4: #{tpu_custom_call.1} parent=1 // loop_header_branch
      %16 = sbr.rel (%p14) target = $region8
    $region5: #{tpu_custom_call.1} parent=1 // loop_body
      %s18 = ssub.s32 %s13, 1
      %s19 = ssub.s32 %s13, 2
      %s20 = sadd.s32 %s13, 1
      %s21 = ssub.s32 %s13, %s20
      %p22 = scmp.eq.s32.totalorder %s21, 0
      %s24 = sadd.s32 %s23, 1
      %s25 = scalar_select %p22, %s23, %s24
      %p28 = pneg %p22
      %p29 = scmp.eq.s32.totalorder %s13, 1
      %p30 = por %p28, %p29
      %p31 = scmp.ne.s32.totalorder %s23, %s26
      %p32 = scmp.eq.s32.totalorder %s13, 0
      %p33 = por %p31, %p32
      %p34 = scmp.ne.s32.totalorder %s23, %s26
      %p35 = scmp.eq.s32.totalorder %s18, 1
      %p36 = por %p34, %p35
      %p37 = scmp.ne.s32.totalorder %s26, %s27
      %p38 = scmp.eq.s32.totalorder %s18, 0
      %p39 = por %p37, %p38
      %p40 = scmp.ne.s32.totalorder %s26, %s27
      %p41 = scmp.eq.s32.totalorder %s19, 1
      %p42 = por %p40, %p41
      %p44 = scmp.ne.s32.totalorder %s27, %s43
      %p45 = scmp.eq.s32.totalorder %s19, 0
      %p46 = por %p44, %p45
      %s47 = ssub.s32 %s13, %s20
      %p48 = scmp.eq.s32.totalorder %s47, 0
      %s50 = sadd.s32 %s49, 1
      %s51 = scalar_select %p48, %s49, %s50
      %p54 = pneg %p48
      %p55 = scmp.eq.s32.totalorder %s13, 1
      %p56 = por %p54, %p55
      %p57 = scmp.ne.s32.totalorder %s49, %s52
      %p58 = scmp.eq.s32.totalorder %s13, 0
      %p59 = por %p57, %p58
      %p60 = scmp.ne.s32.totalorder %s49, %s52
      %p61 = scmp.eq.s32.totalorder %s18, 1
      %p62 = por %p60, %p61
      %p63 = scmp.ne.s32.totalorder %s52, %s53
      %p64 = scmp.eq.s32.totalorder %s18, 0
      %p65 = por %p63, %p64
      %p66 = scmp.ne.s32.totalorder %s52, %s53
      %p67 = scmp.eq.s32.totalorder %s19, 1
      %p68 = por %p66, %p67
      %p70 = scmp.ne.s32.totalorder %s53, %s69
      %p71 = scmp.eq.s32.totalorder %s19, 0
      %p72 = por %p70, %p71
      %s74 = sadd.s32 %s73, 1
      %p77 = scmp.eq.s32.totalorder %s13, 1
      %p78 = scmp.ne.s32.totalorder %s73, %s75
      %p79 = scmp.eq.s32.totalorder %s13, 0
      %p80 = por %p78, %p79
      %p81 = scmp.ne.s32.totalorder %s73, %s75
      %p82 = scmp.eq.s32.totalorder %s18, 1
      %p83 = por %p81, %p82
      %p84 = scmp.ne.s32.totalorder %s75, %s76
      %p85 = scmp.eq.s32.totalorder %s18, 0
      %p86 = por %p84, %p85
      %p87 = scmp.ne.s32.totalorder %s75, %s76
      %p88 = scmp.eq.s32.totalorder %s19, 1
      %p89 = por %p87, %p88
      %p91 = scmp.ne.s32.totalorder %s76, %s90
      %p92 = scmp.eq.s32.totalorder %s19, 0
      %p93 = por %p91, %p92
      %s95 = sadd.s32 %s94, 1
      %p98 = scmp.eq.s32.totalorder %s13, 1
      %p99 = scmp.ne.s32.totalorder %s94, %s96
      %p100 = scmp.eq.s32.totalorder %s13, 0
      %p101 = por %p99, %p100
      %p102 = scmp.ne.s32.totalorder %s94, %s96
      %p103 = scmp.eq.s32.totalorder %s18, 1
      %p104 = por %p102, %p103
      %p105 = scmp.ne.s32.totalorder %s96, %s97
      %p106 = scmp.eq.s32.totalorder %s18, 0
      %p107 = por %p105, %p106
      %p108 = scmp.ne.s32.totalorder %s96, %s97
      %p109 = scmp.eq.s32.totalorder %s19, 1
      %p110 = por %p108, %p109
      %p112 = scmp.ne.s32.totalorder %s97, %s111
      %p113 = scmp.eq.s32.totalorder %s19, 0
      %p114 = por %p112, %p113
      %s115 = ssub.s32 %s13, %s20
      %p116 = scmp.eq.s32.totalorder %s115, 0
      %s118 = sadd.s32 %s117, 1
      %s119 = scalar_select %p116, %s117, %s118
      %p122 = pneg %p116
      %p123 = scmp.eq.s32.totalorder %s13, 1
      %p124 = por %p122, %p123
      %p125 = scmp.ne.s32.totalorder %s117, %s120
      %p126 = scmp.eq.s32.totalorder %s13, 0
      %p127 = por %p125, %p126
      %p128 = scmp.ne.s32.totalorder %s117, %s120
      %p129 = scmp.eq.s32.totalorder %s18, 1
      %p130 = por %p128, %p129
      %p131 = scmp.ne.s32.totalorder %s120, %s121
      %p132 = scmp.eq.s32.totalorder %s18, 0
      %p133 = por %p131, %p132
      %p134 = scmp.ne.s32.totalorder %s120, %s121
      %p135 = scmp.eq.s32.totalorder %s19, 1
      %p136 = por %p134, %p135
      %p138 = scmp.ne.s32.totalorder %s121, %s137
      %p139 = scmp.eq.s32.totalorder %s19, 0
      %p140 = por %p138, %p139
      %p141 = scmp.le.s32.totalorder 1, %s13
      %p142 = scmp.lt.s32.totalorder %s13, 3
      %p143 = pnand %p141, %p142
      %p144 = pneg %p143
      // Predicated region
      $region9: #{tpu_custom_call.1} parent=5 // pred_check
        _
      $region10: #{tpu_custom_call.1} parent=5 // pred_check_branch
        %146 = sbr.rel (%p143) target = $region12
      $region11: #{tpu_custom_call.1} parent=5 // pred_region
        %s147 = ssub.s32 %s13, 1
        // Predicated region
        $region13: #{tpu_custom_call.1} parent=11 // pred_check
          %p148 = pneg %p86
        $region14: #{tpu_custom_call.1} parent=11 // pred_check_branch
          %150 = sbr.rel (%p148) target = $region16
        $region15: #{tpu_custom_call.1} parent=11 // pred_region
          _
        $region16: #{tpu_custom_call.1} parent=11 // pred_fallthru
          _
        // Predicated region
        $region17: #{tpu_custom_call.1} parent=11 // pred_check
          %p151 = pneg %p107
        $region18: #{tpu_custom_call.1} parent=11 // pred_check_branch
          %153 = sbr.rel (%p151) target = $region20
        $region19: #{tpu_custom_call.1} parent=11 // pred_region
          _
        $region20: #{tpu_custom_call.1} parent=11 // pred_fallthru
          _
      $region12: #{tpu_custom_call.1} parent=5 // pred_fallthru
        _
      %p154 = scmp.lt.s32.totalorder %s13, 2
      // Predicated region
      $region21: #{tpu_custom_call.1} parent=5 // pred_check
        %p155 = pneg %p154
      $region22: #{tpu_custom_call.1} parent=5 // pred_check_branch
        %157 = sbr.rel (%p155) target = $region24
      $region23: #{tpu_custom_call.1} parent=5 // pred_region
        // Predicated region
        $region25: #{tpu_custom_call.1} parent=23 // pred_check
          %p158 = pneg %p33
        $region26: #{tpu_custom_call.1} parent=23 // pred_check_branch
          %160 = sbr.rel (%p158) target = $region28
        $region27: #{tpu_custom_call.1} parent=23 // pred_region
          %s161 = smul.u32 16, %s13
          %s162 = ssub.s32 24, %s161
          %p163 = scmp.lt.s32.totalorder %s162, 16
          %s164 = scalar_select %p163, %s162, 16
          %s165 = smul.u32 8, %s164
          %p166 = scmp.lt.s32.totalorder %s161, 23
          %s167 = scalar_select %p166, %s161, 23
          %s168 = smul.addr %s167, 8
          %s169 = scalar_lea.vmem %s0, %s168
          %s170 = smul.u32 16, %s13
          %s171 = ssub.s32 24, %s170
          %p172 = scmp.lt.s32.totalorder %s171, 16
          %s173 = scalar_select %p172, %s171, 16
          %s174 = smul.u32 8, %s173
        $region28: #{tpu_custom_call.1} parent=23 // pred_fallthru
          _
        // Predicated region
        $region29: #{tpu_custom_call.1} parent=23 // pred_check
          %p175 = pneg %p59
        $region30: #{tpu_custom_call.1} parent=23 // pred_check_branch
          %177 = sbr.rel (%p175) target = $region32
        $region31: #{tpu_custom_call.1} parent=23 // pred_region
          %s178 = smul.u32 16, %s13
          %s179 = ssub.s32 24, %s178
          %p180 = scmp.lt.s32.totalorder %s179, 16
          %s181 = scalar_select %p180, %s179, 16
          %s182 = smul.u32 8, %s181
          %p183 = scmp.lt.s32.totalorder %s178, 23
          %s184 = scalar_select %p183, %s178, 23
          %s185 = smul.addr %s184, 8
          %s186 = scalar_lea.vmem %s1, %s185
          %s187 = smul.u32 16, %s13
          %s188 = ssub.s32 24, %s187
          %p189 = scmp.lt.s32.totalorder %s188, 16
          %s190 = scalar_select %p189, %s188, 16
          %s191 = smul.u32 8, %s190
        $region32: #{tpu_custom_call.1} parent=23 // pred_fallthru
          _
      $region24: #{tpu_custom_call.1} parent=5 // pred_fallthru
        _
      %p192 = scmp.le.s32.totalorder 1, %s13
      %p193 = scmp.lt.s32.totalorder %s13, 3
      %p194 = pnand %p192, %p193
      %p195 = pneg %p194
      // Predicated region
      $region33: #{tpu_custom_call.1} parent=5 // pred_check
        _
      $region34: #{tpu_custom_call.1} parent=5 // pred_check_branch
        %197 = sbr.rel (%p194) target = $region36
      $region35: #{tpu_custom_call.1} parent=5 // pred_region
        %s198 = ssub.s32 %s13, 1
        %s199 = smul.u32 16, %s18
        %s200 = ssub.s32 24, %s199
        %p201 = scmp.lt.s32.totalorder %s200, 16
        %s202 = scalar_select %p201, %s200, 16
        %s203 = smul.u32 8, %s202
        %p204 = scmp.lt.s32.totalorder %s199, 23
        %s205 = scalar_select %p204, %s199, 23
        %s206 = smul.addr %s205, 8
        %s207 = scalar_lea.vmem %s0, %s206
        %p208 = pneg %p39
        %p209 = pneg %p36
        %s210 = smul.u32 16, %s18
        %s211 = ssub.s32 24, %s210
        %p212 = scmp.lt.s32.totalorder %s211, 16
        %s213 = scalar_select %p212, %s211, 16
        %s214 = smul.u32 8, %s213
        %p215 = scmp.lt.s32.totalorder %s210, 23
        %s216 = scalar_select %p215, %s210, 23
        %s217 = smul.addr %s216, 8
        %s218 = scalar_lea.vmem %s1, %s217
        %p219 = pneg %p65
        %p220 = pneg %p62
        %p221 = pneg %p86
        %p222 = pneg %p83
        %p223 = pneg %p107
        %p224 = pneg %p104
        %p225 = pneg %p133
        %p226 = pneg %p130
        %s227 = sand.u32 %s120, 1
        %s228 = scalar_lea.sflag [#allocation3], %s227
        %s229 = sand.u32 %s120, 1
        %s230 = scalar_lea.vmem [#allocation2], %s229
        %s231 = smul.u32 16, %s18
        %s232 = ssub.s32 24, %s231
        %p233 = scmp.lt.s32.totalorder %s232, 16
        %s234 = scalar_select %p233, %s232, 16
        %s235 = smul.u32 8, %s234
        %p236 = scmp.lt.s32.totalorder %s231, 23
        %s237 = scalar_select %p236, %s231, 23
        %s238 = smul.addr %s237, 8
        %s239 = scalar_lea.vmem %s0, %s238
        %s240 = smul.u32 16, %s18
        %s241 = ssub.s32 24, %s240
        %p242 = scmp.lt.s32.totalorder %s241, 16
        %s243 = scalar_select %p242, %s241, 16
        %s244 = smul.u32 8, %s243
        %s245 = smul.u32 16, %s18
        %s246 = ssub.s32 24, %s245
        %p247 = scmp.lt.s32.totalorder %s246, 16
        %s248 = scalar_select %p247, %s246, 16
        %s249 = smul.u32 8, %s248
        %p250 = scmp.lt.s32.totalorder %s245, 23
        %s251 = scalar_select %p250, %s245, 23
        %s252 = smul.addr %s251, 8
        %s253 = scalar_lea.vmem %s1, %s252
        %s254 = smul.u32 16, %s18
        %s255 = ssub.s32 24, %s254
        %p256 = scmp.lt.s32.totalorder %s255, 16
        %s257 = scalar_select %p256, %s255, 16
        %s258 = smul.u32 8, %s257
        %v259 = vld [vmem:[%s239] sm:$0xff]
        %v260 = vld [vmem:[%s239 + $0x8] sm:$0xff]
        %v261 = vld [vmem:[%s239 + $0x10] sm:$0xff]
        %v262 = vld [vmem:[%s239 + $0x18] sm:$0xff]
        %v263 = vld [vmem:[%s239 + $0x20] sm:$0xff]
        %v264 = vld [vmem:[%s239 + $0x28] sm:$0xff]
        %v265 = vld [vmem:[%s239 + $0x30] sm:$0xff]
        %v266 = vld [vmem:[%s239 + $0x38] sm:$0xff]
        %v267 = vld [vmem:[%s239 + $0x40] sm:$0xff]
        %v268 = vld [vmem:[%s239 + $0x48] sm:$0xff]
        %v269 = vld [vmem:[%s239 + $0x50] sm:$0xff]
        %v270 = vld [vmem:[%s239 + $0x58] sm:$0xff]
        %v271 = vld [vmem:[%s239 + $0x60] sm:$0xff]
        %v272 = vld [vmem:[%s239 + $0x68] sm:$0xff]
        %v273 = vld [vmem:[%s239 + $0x70] sm:$0xff]
        %v274 = vld [vmem:[%s239 + $0x78] sm:$0xff]
        %v275 = vld [vmem:[%s2] sm:$0xff]
        %v276 = vld [vmem:[%s2 + $0x8] sm:$0xff]
        %v277 = vld [vmem:[%s2 + $0x10] sm:$0xff]
        %v278 = vld [vmem:[%s2 + $0x18] sm:$0xff]
        %vm279 = vcmask 261120
        %v281 = vsel %vm279, %v259, 0
        %v284 = vsel %vm279, %v260, 0
        %v287 = vsel %vm279, %v261, 0
        %v290 = vsel %vm279, %v262, 0
        %v293 = vsel %vm279, %v263, 0
        %v296 = vsel %vm279, %v264, 0
        %v299 = vsel %vm279, %v265, 0
        %v302 = vsel %vm279, %v266, 0
        %v305 = vsel %vm279, %v267, 0
        %v308 = vsel %vm279, %v268, 0
        %v311 = vsel %vm279, %v269, 0
        %v314 = vsel %vm279, %v270, 0
        %v317 = vsel %vm279, %v271, 0
        %v320 = vsel %vm279, %v272, 0
        %v323 = vsel %vm279, %v273, 0
        %v326 = vsel %vm279, %v274, 0
        %328 = vmatpush.msra.mxu0 0.0
        %329 = vmatpush.msra.mxu0 0.0
        %330 = vmatpush.msra.mxu0 0.0
        %331 = vmatpush.msra.mxu0 0.0
        %332 = vmatpush.msra.mxu0 0.0
        %333 = vmatpush.msra.mxu0 0.0
        %334 = vmatpush.msra.mxu0 0.0
        %335 = vmatpush.msra.mxu0 0.0
        %336 = vmatpush.msra.mxu0 0.0
        %337 = vmatpush.msra.mxu0 0.0
        %338 = vmatpush.msra.mxu0 0.0
        %339 = vmatpush.msra.mxu0 0.0
        %340 = vmatpush.msra.mxu0 %v278
        %341 = vmatpush.msra.mxu0 %v277
        %342 = vmatpush.msra.mxu0 %v276
        %343 = vmatpush.msra.mxu0 %v275
        %344 = vmatmul.f32.gmra.mxu0 %v281
        %v345 = vpop.f32.mrf.mxu0
        %v346 = vadd.f32 0.0, %v345
        %347 = vmatmul.f32.gmra.mxu0 %v284
        %v348 = vpop.f32.mrf.mxu0
        %v349 = vadd.f32 0.0, %v348
        %350 = vmatmul.f32.gmra.mxu0 %v287
        %v351 = vpop.f32.mrf.mxu0
        %v352 = vadd.f32 0.0, %v351
        %353 = vmatmul.f32.gmra.mxu0 %v290
        %v354 = vpop.f32.mrf.mxu0
        %v355 = vadd.f32 0.0, %v354
        %356 = vmatmul.f32.gmra.mxu0 %v293
        %v357 = vpop.f32.mrf.mxu0
        %v358 = vadd.f32 0.0, %v357
        %359 = vmatmul.f32.gmra.mxu0 %v296
        %v360 = vpop.f32.mrf.mxu0
        %v361 = vadd.f32 0.0, %v360
        %362 = vmatmul.f32.gmra.mxu0 %v299
        %v363 = vpop.f32.mrf.mxu0
        %v364 = vadd.f32 0.0, %v363
        %365 = vmatmul.f32.gmra.mxu0 %v302
        %v366 = vpop.f32.mrf.mxu0
        %v367 = vadd.f32 0.0, %v366
        %368 = vmatmul.f32.gmra.mxu0 %v305
        %v369 = vpop.f32.mrf.mxu0
        %v370 = vadd.f32 0.0, %v369
        %371 = vmatmul.f32.gmra.mxu0 %v308
        %v372 = vpop.f32.mrf.mxu0
        %v373 = vadd.f32 0.0, %v372
        %374 = vmatmul.f32.gmra.mxu0 %v311
        %v375 = vpop.f32.mrf.mxu0
        %v376 = vadd.f32 0.0, %v375
        %377 = vmatmul.f32.gmra.mxu0 %v314
        %v378 = vpop.f32.mrf.mxu0
        %v379 = vadd.f32 0.0, %v378
        %380 = vmatmul.f32.gmra.mxu0 %v317
        %v381 = vpop.f32.mrf.mxu0
        %v382 = vadd.f32 0.0, %v381
        %383 = vmatmul.f32.gmra.mxu0 %v320
        %v384 = vpop.f32.mrf.mxu0
        %v385 = vadd.f32 0.0, %v384
        %386 = vmatmul.f32.gmra.mxu0 %v323
        %v387 = vpop.f32.mrf.mxu0
        %v388 = vadd.f32 0.0, %v387
        %389 = vmatmul.f32.gmra.mxu0 %v326
        %v390 = vpop.f32.mrf.mxu0
        %v391 = vadd.f32 0.0, %v390
        %392 = vdwg.mxu0
        %v393 = vld [vmem:[%s253] sm:$0xff]
        %v394 = vld [vmem:[%s253 + $0x8] sm:$0xff]
        %v395 = vld [vmem:[%s253 + $0x10] sm:$0xff]
        %v396 = vld [vmem:[%s253 + $0x18] sm:$0xff]
        %v397 = vld [vmem:[%s253 + $0x20] sm:$0xff]
        %v398 = vld [vmem:[%s253 + $0x28] sm:$0xff]
        %v399 = vld [vmem:[%s253 + $0x30] sm:$0xff]
        %v400 = vld [vmem:[%s253 + $0x38] sm:$0xff]
        %v401 = vld [vmem:[%s253 + $0x40] sm:$0xff]
        %v402 = vld [vmem:[%s253 + $0x48] sm:$0xff]
        %v403 = vld [vmem:[%s253 + $0x50] sm:$0xff]
        %v404 = vld [vmem:[%s253 + $0x58] sm:$0xff]
        %v405 = vld [vmem:[%s253 + $0x60] sm:$0xff]
        %v406 = vld [vmem:[%s253 + $0x68] sm:$0xff]
        %v407 = vld [vmem:[%s253 + $0x70] sm:$0xff]
        %v408 = vld [vmem:[%s253 + $0x78] sm:$0xff]
        %v409 = vld [vmem:[%s3] sm:$0xff]
        %v410 = vld [vmem:[%s3 + $0x8] sm:$0xff]
        %v411 = vld [vmem:[%s3 + $0x10] sm:$0xff]
        %v412 = vld [vmem:[%s3 + $0x18] sm:$0xff]
        %v414 = vsel %vm279, %v393, 0
        %v417 = vsel %vm279, %v394, 0
        %v420 = vsel %vm279, %v395, 0
        %v423 = vsel %vm279, %v396, 0
        %v426 = vsel %vm279, %v397, 0
        %v429 = vsel %vm279, %v398, 0
        %v432 = vsel %vm279, %v399, 0
        %v435 = vsel %vm279, %v400, 0
        %v438 = vsel %vm279, %v401, 0
        %v441 = vsel %vm279, %v402, 0
        %v444 = vsel %vm279, %v403, 0
        %v447 = vsel %vm279, %v404, 0
        %v450 = vsel %vm279, %v405, 0
        %v453 = vsel %vm279, %v406, 0
        %v456 = vsel %vm279, %v407, 0
        %v459 = vsel %vm279, %v408, 0
        %461 = vmatpush.msra.mxu0 0.0
        %462 = vmatpush.msra.mxu0 0.0
        %463 = vmatpush.msra.mxu0 0.0
        %464 = vmatpush.msra.mxu0 0.0
        %465 = vmatpush.msra.mxu0 0.0
        %466 = vmatpush.msra.mxu0 0.0
        %467 = vmatpush.msra.mxu0 0.0
        %468 = vmatpush.msra.mxu0 0.0
        %469 = vmatpush.msra.mxu0 0.0
        %470 = vmatpush.msra.mxu0 0.0
        %471 = vmatpush.msra.mxu0 0.0
        %472 = vmatpush.msra.mxu0 0.0
        %473 = vmatpush.msra.mxu0 %v412
        %474 = vmatpush.msra.mxu0 %v411
        %475 = vmatpush.msra.mxu0 %v410
        %476 = vmatpush.msra.mxu0 %v409
        %477 = vmatmul.f32.gmra.mxu0 %v414
        %v478 = vpop.f32.mrf.mxu0
        %v479 = vadd.f32 0.0, %v478
        %480 = vmatmul.f32.gmra.mxu0 %v417
        %v481 = vpop.f32.mrf.mxu0
        %v482 = vadd.f32 0.0, %v481
        %483 = vmatmul.f32.gmra.mxu0 %v420
        %v484 = vpop.f32.mrf.mxu0
        %v485 = vadd.f32 0.0, %v484
        %486 = vmatmul.f32.gmra.mxu0 %v423
        %v487 = vpop.f32.mrf.mxu0
        %v488 = vadd.f32 0.0, %v487
        %489 = vmatmul.f32.gmra.mxu0 %v426
        %v490 = vpop.f32.mrf.mxu0
        %v491 = vadd.f32 0.0, %v490
        %492 = vmatmul.f32.gmra.mxu0 %v429
        %v493 = vpop.f32.mrf.mxu0
        %v494 = vadd.f32 0.0, %v493
        %495 = vmatmul.f32.gmra.mxu0 %v432
        %v496 = vpop.f32.mrf.mxu0
        %v497 = vadd.f32 0.0, %v496
        %498 = vmatmul.f32.gmra.mxu0 %v435
        %v499 = vpop.f32.mrf.mxu0
        %v500 = vadd.f32 0.0, %v499
        %501 = vmatmul.f32.gmra.mxu0 %v438
        %v502 = vpop.f32.mrf.mxu0
        %v503 = vadd.f32 0.0, %v502
        %504 = vmatmul.f32.gmra.mxu0 %v441
        %v505 = vpop.f32.mrf.mxu0
        %v506 = vadd.f32 0.0, %v505
        %507 = vmatmul.f32.gmra.mxu0 %v444
        %v508 = vpop.f32.mrf.mxu0
        %v509 = vadd.f32 0.0, %v508
        %510 = vmatmul.f32.gmra.mxu0 %v447
        %v511 = vpop.f32.mrf.mxu0
        %v512 = vadd.f32 0.0, %v511
        %513 = vmatmul.f32.gmra.mxu0 %v450
        %v514 = vpop.f32.mrf.mxu0
        %v515 = vadd.f32 0.0, %v514
        %516 = vmatmul.f32.gmra.mxu0 %v453
        %v517 = vpop.f32.mrf.mxu0
        %v518 = vadd.f32 0.0, %v517
        %519 = vmatmul.f32.gmra.mxu0 %v456
        %v520 = vpop.f32.mrf.mxu0
        %v521 = vadd.f32 0.0, %v520
        %522 = vmatmul.f32.gmra.mxu0 %v459
        %v523 = vpop.f32.mrf.mxu0
        %v524 = vadd.f32 0.0, %v523
        %525 = vdwg.mxu0
        %v526 = vmul.f32 %v346, %v479
        %v527 = vmul.f32 %v349, %v482
        %v528 = vmul.f32 %v352, %v485
        %v529 = vmul.f32 %v355, %v488
        %v530 = vmul.f32 %v358, %v491
        %v531 = vmul.f32 %v361, %v494
        %v532 = vmul.f32 %v364, %v497
        %v533 = vmul.f32 %v367, %v500
        %v534 = vmul.f32 %v370, %v503
        %v535 = vmul.f32 %v373, %v506
        %v536 = vmul.f32 %v376, %v509
        %v537 = vmul.f32 %v379, %v512
        %v538 = vmul.f32 %v382, %v515
        %v539 = vmul.f32 %v385, %v518
        %v540 = vmul.f32 %v388, %v521
        %v541 = vmul.f32 %v391, %v524
        %vm542 = vcmask 130048
        %v543 = vsel %vm542, %v526, 0.0
        %544 = vadd.xlane.f32.xlu0 %v543
        %v545 = vpop.xlane.xlu0 %544
        %v546 = vsel %vm542, %v527, 0.0
        %547 = vadd.xlane.f32.xlu0 %v546
        %v548 = vpop.xlane.xlu0 %547
        %v549 = vsel %vm542, %v528, 0.0
        %550 = vadd.xlane.f32.xlu0 %v549
        %v551 = vpop.xlane.xlu0 %550
        %v552 = vsel %vm542, %v529, 0.0
        %553 = vadd.xlane.f32.xlu0 %v552
        %v554 = vpop.xlane.xlu0 %553
        %v555 = vsel %vm542, %v530, 0.0
        %556 = vadd.xlane.f32.xlu0 %v555
        %v557 = vpop.xlane.xlu0 %556
        %v558 = vsel %vm542, %v531, 0.0
        %559 = vadd.xlane.f32.xlu0 %v558
        %v560 = vpop.xlane.xlu0 %559
        %v561 = vsel %vm542, %v532, 0.0
        %562 = vadd.xlane.f32.xlu0 %v561
        %v563 = vpop.xlane.xlu0 %562
        %v564 = vsel %vm542, %v533, 0.0
        %565 = vadd.xlane.f32.xlu0 %v564
        %v566 = vpop.xlane.xlu0 %565
        %v567 = vsel %vm542, %v534, 0.0
        %568 = vadd.xlane.f32.xlu0 %v567
        %v569 = vpop.xlane.xlu0 %568
        %v570 = vsel %vm542, %v535, 0.0
        %571 = vadd.xlane.f32.xlu0 %v570
        %v572 = vpop.xlane.xlu0 %571
        %v573 = vsel %vm542, %v536, 0.0
        %574 = vadd.xlane.f32.xlu0 %v573
        %v575 = vpop.xlane.xlu0 %574
        %v576 = vsel %vm542, %v537, 0.0
        %577 = vadd.xlane.f32.xlu0 %v576
        %v578 = vpop.xlane.xlu0 %577
        %v579 = vsel %vm542, %v538, 0.0
        %580 = vadd.xlane.f32.xlu0 %v579
        %v581 = vpop.xlane.xlu0 %580
        %v582 = vsel %vm542, %v539, 0.0
        %583 = vadd.xlane.f32.xlu0 %v582
        %v584 = vpop.xlane.xlu0 %583
        %v585 = vsel %vm542, %v540, 0.0
        %586 = vadd.xlane.f32.xlu0 %v585
        %v587 = vpop.xlane.xlu0 %586
        %v588 = vsel %vm542, %v541, 0.0
        %589 = vadd.xlane.f32.xlu0 %v588
        %v590 = vpop.xlane.xlu0 %589
        %v607 = vlaneseq
        %v608 = vand.u32 %v607, 127
        %v609 = vperm.slane %v545, %v608
        %v610 = vadd.s32 %v608, 4294967288
        %v611 = vperm.slane %v548, %v610
        %vm612 = vcmask 130112
        %v613 = vsel %vm612, %v611, %v609
        %v614 = vadd.s32 %v608, 4294967280
        %v615 = vperm.slane %v551, %v614
        %vm616 = vcmask 195712
        %v617 = vsel %vm616, %v615, %v613
        %v618 = vadd.s32 %v608, 4294967272
        %v619 = vperm.slane %v554, %v618
        %vm620 = vcmask 261312
        %v621 = vsel %vm620, %v619, %v617
        %v622 = vadd.s32 %v608, 4294967264
        %v623 = vperm.slane %v557, %v622
        %vm624 = vcmask 326912
        %v625 = vsel %vm624, %v623, %v621
        %v626 = vadd.s32 %v608, 4294967256
        %v627 = vperm.slane %v560, %v626
        %vm628 = vcmask 392512
        %v629 = vsel %vm628, %v627, %v625
        %v630 = vadd.s32 %v608, 4294967248
        %v631 = vperm.slane %v563, %v630
        %vm632 = vcmask 458112
        %v633 = vsel %vm632, %v631, %v629
        %v634 = vadd.s32 %v608, 4294967240
        %v635 = vperm.slane %v566, %v634
        %vm636 = vcmask 523712
        %v637 = vsel %vm636, %v635, %v633
        %v638 = vadd.s32 %v608, 4294967232
        %v639 = vperm.slane %v569, %v638
        %vm640 = vcmask 589312
        %v641 = vsel %vm640, %v639, %v637
        %v642 = vadd.s32 %v608, 4294967224
        %v643 = vperm.slane %v572, %v642
        %vm644 = vcmask 654912
        %v645 = vsel %vm644, %v643, %v641
        %v646 = vadd.s32 %v608, 4294967216
        %v647 = vperm.slane %v575, %v646
        %vm648 = vcmask 720512
        %v649 = vsel %vm648, %v647, %v645
        %v650 = vadd.s32 %v608, 4294967208
        %v651 = vperm.slane %v578, %v650
        %vm652 = vcmask 786112
        %v653 = vsel %vm652, %v651, %v649
        %v654 = vadd.s32 %v608, 4294967200
        %v655 = vperm.slane %v581, %v654
        %vm656 = vcmask 851712
        %v657 = vsel %vm656, %v655, %v653
        %v658 = vadd.s32 %v608, 4294967192
        %v659 = vperm.slane %v584, %v658
        %vm660 = vcmask 917312
        %v661 = vsel %vm660, %v659, %v657
        %v662 = vadd.s32 %v608, 4294967184
        %v663 = vperm.slane %v587, %v662
        %vm664 = vcmask 982912
        %v665 = vsel %vm664, %v663, %v661
        %v666 = vadd.s32 %v608, 4294967176
        %v667 = vperm.slane %v590, %v666
        %vm668 = vcmask 1048512
        %v669 = vsel %vm668, %v667, %v665
        %671 = vst [vmem:[%s230] sm:$0x1] %v669
        %s672 = sand.u32 %s120, 1
        %s673 = scalar_lea.sflag [#allocation3], %s672
        %s674 = sand.u32 %s120, 1
        %s675 = scalar_lea.vmem [#allocation2], %s674
        // Predicated region
        $region37: #{tpu_custom_call.1} parent=35 // pred_check
          %p676 = pneg %p130
        $region38: #{tpu_custom_call.1} parent=35 // pred_check_branch
          %678 = sbr.rel (%p676) target = $region40
        $region39: #{tpu_custom_call.1} parent=35 // pred_region
          %680 = vsyncadd %s673, 0
          %s681 = scalar_lea.hbm %s4, %s18
          %s683 = sshll.u32 %s675, 4
          %s684 = int_to_ptr.vmem [resolvable:$true] %s683
          %s685 = sshll.u32 %s681, 4
          %s686 = int_to_ptr.hbm [resolvable:$true] %s685
          %688 = dma.vmem_to_hbm [thread:$0]  %s684, 16, %s686, %s673
        $region40: #{tpu_custom_call.1} parent=35 // pred_fallthru
          _
      $region36: #{tpu_custom_call.1} parent=5 // pred_fallthru
        _
      %p689 = scmp.le.s32.totalorder 2, %s13
      // Predicated region
      $region41: #{tpu_custom_call.1} parent=5 // pred_check
        %p690 = pneg %p689
      $region42: #{tpu_custom_call.1} parent=5 // pred_check_branch
        %692 = sbr.rel (%p690) target = $region44
      $region43: #{tpu_custom_call.1} parent=5 // pred_region
        %s693 = ssub.s32 %s13, 2
        // Predicated region
        $region45: #{tpu_custom_call.1} parent=43 // pred_check
          %p694 = pneg %p136
        $region46: #{tpu_custom_call.1} parent=43 // pred_check_branch
          %696 = sbr.rel (%p694) target = $region48
        $region47: #{tpu_custom_call.1} parent=43 // pred_region
          %s697 = sand.u32 %s121, 1
          %s698 = scalar_lea.sflag [#allocation3], %s697
          %s699 = sand.u32 %s121, 1
          %s700 = scalar_lea.vmem [#allocation2], %s699
          %702 = dma.done %s698, 16
        $region48: #{tpu_custom_call.1} parent=43 // pred_fallthru
          _
      $region44: #{tpu_custom_call.1} parent=5 // pred_fallthru
        _
    $region6: #{tpu_custom_call.1} parent=1 // loop_footer
      %s17 = sadd.s32 1, %s13
    $region7: #{tpu_custom_call.1} parent=1 // loop_footer_branch
      %12 = sbr.rel target = $region3
    $region8: #{tpu_custom_call.1} parent=1 // loop_exit
      _
    %703 = vsyncpa [#allocation3], 1
    %s704 = scalar_lea.sflag [#allocation3], 1
    %705 = vsyncpa %s704, 1

// kernel: tpu_custom_call.1
$region0: #{tpu_custom_call.1}
  #allocation0 [shape = 'u32[]', space=smem, size = 0x4, offset = 0x4, fixed_abs, tag = 'smem constant byte address 0x4 - core index']
  #allocation1 [shape = 'u32[72,128]{1,0:T(1,128)}', space=vmem, size = 0x9000, scoped, tag = 'internal scratch']
  %s0 = inlined_call_operand.vmem [shape: f32[192,32], index: 0, kind: input, shape index: {}]
  %s1 = inlined_call_operand.vmem [shape: f32[192,32], index: 1, kind: input, shape index: {}]
  %s2 = inlined_call_operand.vmem [shape: f32[32,16], index: 2, kind: input, shape index: {}]
  %s3 = inlined_call_operand.vmem [shape: f32[32,16], index: 3, kind: input, shape index: {}]
  %s4 = inlined_call_operand.hbm [shape: f32[1,192], index: 4, kind: output, shape index: {}]
  %s5 = sld [smem:[#allocation0]]
  $region49: #{tpu_custom_call.1} parent=0
    _
  %s7 = ssub.s32 1, %s5
  %s8 = scalar_select 0, %s7, %s5
  $region1: #{tpu_custom_call.1} parent=0
    #allocation2 [shape = 'u8[1024]{0}', space=vmem, size = 0x400, scoped, tag = 'output window, operand 0']
    #allocation3 [shape = 's32[2]{0}', space=sflag, size = 0x8, scoped, tag = 'scoped memory for tpu_custom_call.1']
    %9 = vsyncpa [#allocation3], 0
    %s10 = scalar_lea.sflag [#allocation3], 1
    %11 = vsyncpa %s10, 0
    loop: start=0, step=1, limit=4
    $region2: #{tpu_custom_call.1} parent=1 // loop_pre_header
      _
    $region3: #{tpu_custom_call.1} parent=1 // loop_header
      %s13 = sphi 0, %s17
      %p14 = scmp.ge.s32.totalorder %s13, 4
      %s23 = sphi 0, %s25
      %s26 = sphi 0, %s23
      %s27 = sphi 0, %s26
      %s43 = sphi 0, %s27
      %s49 = sphi 0, %s51
      %s52 = sphi 0, %s49
      %s53 = sphi 0, %s52
      %s69 = sphi 0, %s53
      %s73 = sphi 0, %s73
      %s75 = sphi 0, %s73
      %s76 = sphi 0, %s75
      %s90 = sphi 0, %s76
      %s94 = sphi 0, %s94
      %s96 = sphi 0, %s94
      %s97 = sphi 0, %s96
      %s111 = sphi 0, %s97
      %s117 = sphi 0, %s119
      %s120 = sphi 0, %s117
      %s121 = sphi 0, %s120
      %s137 = sphi 0, %s121
    $region4: #{tpu_custom_call.1} parent=1 // loop_header_branch
      %16 = sbr.rel (%p14) target = $region8
    $region5: #{tpu_custom_call.1} parent=1 // loop_body
      %s18 = ssub.s32 %s13, 1
      %s19 = ssub.s32 %s13, 2
      %s20 = sadd.s32 %s13, 1
      %s21 = ssub.s32 %s13, %s20
      %p22 = scmp.eq.s32.totalorder %s21, 0
      %s24 = sadd.s32 %s23, 1
      %s25 = scalar_select %p22, %s23, %s24
      %p28 = pneg %p22
      %p29 = scmp.eq.s32.totalorder %s13, 1
      %p30 = por %p28, %p29
      %p31 = scmp.ne.s32.totalorder %s23, %s26
      %p32 = scmp.eq.s32.totalorder %s13, 0
      %p33 = por %p31, %p32
      %p34 = scmp.ne.s32.totalorder %s23, %s26
      %p35 = scmp.eq.s32.totalorder %s18, 1
      %p36 = por %p34, %p35
      %p37 = scmp.ne.s32.totalorder %s26, %s27
      %p38 = scmp.eq.s32.totalorder %s18, 0
      %p39 = por %p37, %p38
      %p40 = scmp.ne.s32.totalorder %s26, %s27
      %p41 = scmp.eq.s32.totalorder %s19, 1
      %p42 = por %p40, %p41
      %p44 = scmp.ne.s32.totalorder %s27, %s43
      %p45 = scmp.eq.s32.totalorder %s19, 0
      %p46 = por %p44, %p45
      %s47 = ssub.s32 %s13, %s20
      %p48 = scmp.eq.s32.totalorder %s47, 0
      %s50 = sadd.s32 %s49, 1
      %s51 = scalar_select %p48, %s49, %s50
      %p54 = pneg %p48
      %p55 = scmp.eq.s32.totalorder %s13, 1
      %p56 = por %p54, %p55
      %p57 = scmp.ne.s32.totalorder %s49, %s52
      %p58 = scmp.eq.s32.totalorder %s13, 0
      %p59 = por %p57, %p58
      %p60 = scmp.ne.s32.totalorder %s49, %s52
      %p61 = scmp.eq.s32.totalorder %s18, 1
      %p62 = por %p60, %p61
      %p63 = scmp.ne.s32.totalorder %s52, %s53
      %p64 = scmp.eq.s32.totalorder %s18, 0
      %p65 = por %p63, %p64
      %p66 = scmp.ne.s32.totalorder %s52, %s53
      %p67 = scmp.eq.s32.totalorder %s19, 1
      %p68 = por %p66, %p67
      %p70 = scmp.ne.s32.totalorder %s53, %s69
      %p71 = scmp.eq.s32.totalorder %s19, 0
      %p72 = por %p70, %p71
      %s74 = sadd.s32 %s73, 1
      %p77 = scmp.eq.s32.totalorder %s13, 1
      %p78 = scmp.ne.s32.totalorder %s73, %s75
      %p79 = scmp.eq.s32.totalorder %s13, 0
      %p80 = por %p78, %p79
      %p81 = scmp.ne.s32.totalorder %s73, %s75
      %p82 = scmp.eq.s32.totalorder %s18, 1
      %p83 = por %p81, %p82
      %p84 = scmp.ne.s32.totalorder %s75, %s76
      %p85 = scmp.eq.s32.totalorder %s18, 0
      %p86 = por %p84, %p85
      %p87 = scmp.ne.s32.totalorder %s75, %s76
      %p88 = scmp.eq.s32.totalorder %s19, 1
      %p89 = por %p87, %p88
      %p91 = scmp.ne.s32.totalorder %s76, %s90
      %p92 = scmp.eq.s32.totalorder %s19, 0
      %p93 = por %p91, %p92
      %s95 = sadd.s32 %s94, 1
      %p98 = scmp.eq.s32.totalorder %s13, 1
      %p99 = scmp.ne.s32.totalorder %s94, %s96
      %p100 = scmp.eq.s32.totalorder %s13, 0
      %p101 = por %p99, %p100
      %p102 = scmp.ne.s32.totalorder %s94, %s96
      %p103 = scmp.eq.s32.totalorder %s18, 1
      %p104 = por %p102, %p103
      %p105 = scmp.ne.s32.totalorder %s96, %s97
      %p106 = scmp.eq.s32.totalorder %s18, 0
      %p107 = por %p105, %p106
      %p108 = scmp.ne.s32.totalorder %s96, %s97
      %p109 = scmp.eq.s32.totalorder %s19, 1
      %p110 = por %p108, %p109
      %p112 = scmp.ne.s32.totalorder %s97, %s111
      %p113 = scmp.eq.s32.totalorder %s19, 0
      %p114 = por %p112, %p113
      %s115 = ssub.s32 %s13, %s20
      %p116 = scmp.eq.s32.totalorder %s115, 0
      %s118 = sadd.s32 %s117, 1
      %s119 = scalar_select %p116, %s117, %s118
      %p122 = pneg %p116
      %p123 = scmp.eq.s32.totalorder %s13, 1
      %p124 = por %p122, %p123
      %p125 = scmp.ne.s32.totalorder %s117, %s120
      %p126 = scmp.eq.s32.totalorder %s13, 0
      %p127 = por %p125, %p126
      %p128 = scmp.ne.s32.totalorder %s117, %s120
      %p129 = scmp.eq.s32.totalorder %s18, 1
      %p130 = por %p128, %p129
      %p131 = scmp.ne.s32.totalorder %s120, %s121
      %p132 = scmp.eq.s32.totalorder %s18, 0
      %p133 = por %p131, %p132
      %p134 = scmp.ne.s32.totalorder %s120, %s121
      %p135 = scmp.eq.s32.totalorder %s19, 1
      %p136 = por %p134, %p135
      %p138 = scmp.ne.s32.totalorder %s121, %s137
      %p139 = scmp.eq.s32.totalorder %s19, 0
      %p140 = por %p138, %p139
      %p141 = scmp.le.s32.totalorder 1, %s13
      %p142 = scmp.lt.s32.totalorder %s13, 3
      %p143 = pnand %p141, %p142
      %p144 = pneg %p143
      // Predicated region
      $region9: #{tpu_custom_call.1} parent=5 // pred_check
        _
      $region10: #{tpu_custom_call.1} parent=5 // pred_check_branch
        %146 = sbr.rel (%p143) target = $region12
      $region11: #{tpu_custom_call.1} parent=5 // pred_region
        %s147 = ssub.s32 %s13, 1
        // Predicated region
        $region13: #{tpu_custom_call.1} parent=11 // pred_check
          %p148 = pneg %p86
        $region14: #{tpu_custom_call.1} parent=11 // pred_check_branch
          %150 = sbr.rel (%p148) target = $region16
        $region15: #{tpu_custom_call.1} parent=11 // pred_region
          _
        $region16: #{tpu_custom_call.1} parent=11 // pred_fallthru
          _
        // Predicated region
        $region17: #{tpu_custom_call.1} parent=11 // pred_check
          %p151 = pneg %p107
        $region18: #{tpu_custom_call.1} parent=11 // pred_check_branch
          %153 = sbr.rel (%p151) target = $region20
        $region19: #{tpu_custom_call.1} parent=11 // pred_region
          _
        $region20: #{tpu_custom_call.1} parent=11 // pred_fallthru
          _
      $region12: #{tpu_custom_call.1} parent=5 // pred_fallthru
        _
      %p154 = scmp.lt.s32.totalorder %s13, 2
      // Predicated region
      $region21: #{tpu_custom_call.1} parent=5 // pred_check
        %p155 = pneg %p154
      $region22: #{tpu_custom_call.1} parent=5 // pred_check_branch
        %157 = sbr.rel (%p155) target = $region24
      $region23: #{tpu_custom_call.1} parent=5 // pred_region
        // Predicated region
        $region25: #{tpu_custom_call.1} parent=23 // pred_check
          %p158 = pneg %p33
        $region26: #{tpu_custom_call.1} parent=23 // pred_check_branch
          %160 = sbr.rel (%p158) target = $region28
        $region27: #{tpu_custom_call.1} parent=23 // pred_region
          %s161 = smul.u32 16, %s13
          %s162 = ssub.s32 24, %s161
          %p163 = scmp.lt.s32.totalorder %s162, 16
          %s164 = scalar_select %p163, %s162, 16
          %s165 = smul.u32 8, %s164
          %p166 = scmp.lt.s32.totalorder %s161, 23
          %s167 = scalar_select %p166, %s161, 23
          %s168 = smul.addr %s167, 8
          %s169 = scalar_lea.vmem %s0, %s168
          %s170 = smul.u32 16, %s13
          %s171 = ssub.s32 24, %s170
          %p172 = scmp.lt.s32.totalorder %s171, 16
          %s173 = scalar_select %p172, %s171, 16
          %s174 = smul.u32 8, %s173
        $region28: #{tpu_custom_call.1} parent=23 // pred_fallthru
          _
        // Predicated region
        $region29: #{tpu_custom_call.1} parent=23 // pred_check
          %p175 = pneg %p59
        $region30: #{tpu_custom_call.1} parent=23 // pred_check_branch
          %177 = sbr.rel (%p175) target = $region32
        $region31: #{tpu_custom_call.1} parent=23 // pred_region
          %s178 = smul.u32 16, %s13
          %s179 = ssub.s32 24, %s178
          %p180 = scmp.lt.s32.totalorder %s179, 16
          %s181 = scalar_select %p180, %s179, 16
          %s182 = smul.u32 8, %s181
          %p183 = scmp.lt.s32.totalorder %s178, 23
          %s184 = scalar_select %p183, %s178, 23
          %s185 = smul.addr %s184, 8
          %s186 = scalar_lea.vmem %s1, %s185
          %s187 = smul.u32 16, %s13
          %s188 = ssub.s32 24, %s187
          %p189 = scmp.lt.s32.totalorder %s188, 16
          %s190 = scalar_select %p189, %s188, 16
          %s191 = smul.u32 8, %s190
        $region32: #{tpu_custom_call.1} parent=23 // pred_fallthru
          _
      $region24: #{tpu_custom_call.1} parent=5 // pred_fallthru
        _
      %p192 = scmp.le.s32.totalorder 1, %s13
      %p193 = scmp.lt.s32.totalorder %s13, 3
      %p194 = pnand %p192, %p193
      %p195 = pneg %p194
      // Predicated region
      $region33: #{tpu_custom_call.1} parent=5 // pred_check
        _
      $region34: #{tpu_custom_call.1} parent=5 // pred_check_branch
        %197 = sbr.rel (%p194) target = $region36
      $region35: #{tpu_custom_call.1} parent=5 // pred_region
        %s198 = ssub.s32 %s13, 1
        %s199 = smul.u32 16, %s18
        %s200 = ssub.s32 24, %s199
        %p201 = scmp.lt.s32.totalorder %s200, 16
        %s202 = scalar_select %p201, %s200, 16
        %s203 = smul.u32 8, %s202
        %p204 = scmp.lt.s32.totalorder %s199, 23
        %s205 = scalar_select %p204, %s199, 23
        %s206 = smul.addr %s205, 8
        %s207 = scalar_lea.vmem %s0, %s206
        %p208 = pneg %p39
        %p209 = pneg %p36
        %s210 = smul.u32 16, %s18
        %s211 = ssub.s32 24, %s210
        %p212 = scmp.lt.s32.totalorder %s211, 16
        %s213 = scalar_select %p212, %s211, 16
        %s214 = smul.u32 8, %s213
        %p215 = scmp.lt.s32.totalorder %s210, 23
        %s216 = scalar_select %p215, %s210, 23
        %s217 = smul.addr %s216, 8
        %s218 = scalar_lea.vmem %s1, %s217
        %p219 = pneg %p65
        %p220 = pneg %p62
        %p221 = pneg %p86
        %p222 = pneg %p83
        %p223 = pneg %p107
        %p224 = pneg %p104
        %p225 = pneg %p133
        %p226 = pneg %p130
        %s227 = sand.u32 %s120, 1
        %s228 = scalar_lea.sflag [#allocation3], %s227
        %s229 = sand.u32 %s120, 1
        %s230 = scalar_lea.vmem [#allocation2], %s229
        %s231 = smul.u32 16, %s18
        %s232 = ssub.s32 24, %s231
        %p233 = scmp.lt.s32.totalorder %s232, 16
        %s234 = scalar_select %p233, %s232, 16
        %s235 = smul.u32 8, %s234
        %p236 = scmp.lt.s32.totalorder %s231, 23
        %s237 = scalar_select %p236, %s231, 23
        %s238 = smul.addr %s237, 8
        %s239 = scalar_lea.vmem %s0, %s238
        %s240 = smul.u32 16, %s18
        %s241 = ssub.s32 24, %s240
        %p242 = scmp.lt.s32.totalorder %s241, 16
        %s243 = scalar_select %p242, %s241, 16
        %s244 = smul.u32 8, %s243
        %s245 = smul.u32 16, %s18
        %s246 = ssub.s32 24, %s245
        %p247 = scmp.lt.s32.totalorder %s246, 16
        %s248 = scalar_select %p247, %s246, 16
        %s249 = smul.u32 8, %s248
        %p250 = scmp.lt.s32.totalorder %s245, 23
        %s251 = scalar_select %p250, %s245, 23
        %s252 = smul.addr %s251, 8
        %s253 = scalar_lea.vmem %s1, %s252
        %s254 = smul.u32 16, %s18
        %s255 = ssub.s32 24, %s254
        %p256 = scmp.lt.s32.totalorder %s255, 16
        %s257 = scalar_select %p256, %s255, 16
        %s258 = smul.u32 8, %s257
        %v259 = vld [vmem:[%s239] sm:$0xff]
        %v260 = vld [vmem:[%s239 + $0x8] sm:$0xff]
        %v261 = vld [vmem:[%s239 + $0x10] sm:$0xff]
        %v262 = vld [vmem:[%s239 + $0x18] sm:$0xff]
        %v263 = vld [vmem:[%s239 + $0x20] sm:$0xff]
        %v264 = vld [vmem:[%s239 + $0x28] sm:$0xff]
        %v265 = vld [vmem:[%s239 + $0x30] sm:$0xff]
        %v266 = vld [vmem:[%s239 + $0x38] sm:$0xff]
        %v267 = vld [vmem:[%s239 + $0x40] sm:$0xff]
        %v268 = vld [vmem:[%s239 + $0x48] sm:$0xff]
        %v269 = vld [vmem:[%s239 + $0x50] sm:$0xff]
        %v270 = vld [vmem:[%s239 + $0x58] sm:$0xff]
        %v271 = vld [vmem:[%s239 + $0x60] sm:$0xff]
        %v272 = vld [vmem:[%s239 + $0x68] sm:$0xff]
        %v273 = vld [vmem:[%s239 + $0x70] sm:$0xff]
        %v274 = vld [vmem:[%s239 + $0x78] sm:$0xff]
        %v275 = vld [vmem:[%s2] sm:$0xff]
        %v276 = vld [vmem:[%s2 + $0x8] sm:$0xff]
        %v277 = vld [vmem:[%s2 + $0x10] sm:$0xff]
        %v278 = vld [vmem:[%s2 + $0x18] sm:$0xff]
        %vm279 = vcmask 261120
        %v281 = vsel %vm279, %v259, 0
        %v284 = vsel %vm279, %v260, 0
        %v287 = vsel %vm279, %v261, 0
        %v290 = vsel %vm279, %v262, 0
        %v293 = vsel %vm279, %v263, 0
        %v296 = vsel %vm279, %v264, 0
        %v299 = vsel %vm279, %v265, 0
        %v302 = vsel %vm279, %v266, 0
        %v305 = vsel %vm279, %v267, 0
        %v308 = vsel %vm279, %v268, 0
        %v311 = vsel %vm279, %v269, 0
        %v314 = vsel %vm279, %v270, 0
        %v317 = vsel %vm279, %v271, 0
        %v320 = vsel %vm279, %v272, 0
        %v323 = vsel %vm279, %v273, 0
        %v326 = vsel %vm279, %v274, 0
        %328 = vmatpush.msra.mxu0 0.0
        %329 = vmatpush.msra.mxu0 0.0
        %330 = vmatpush.msra.mxu0 0.0
        %331 = vmatpush.msra.mxu0 0.0
        %332 = vmatpush.msra.mxu0 0.0
        %333 = vmatpush.msra.mxu0 0.0
        %334 = vmatpush.msra.mxu0 0.0
        %335 = vmatpush.msra.mxu0 0.0
        %336 = vmatpush.msra.mxu0 0.0
        %337 = vmatpush.msra.mxu0 0.0
        %338 = vmatpush.msra.mxu0 0.0
        %339 = vmatpush.msra.mxu0 0.0
        %340 = vmatpush.msra.mxu0 %v278
        %341 = vmatpush.msra.mxu0 %v277
        %342 = vmatpush.msra.mxu0 %v276
        %343 = vmatpush.msra.mxu0 %v275
        %344 = vmatmul.f32.gmra.mxu0 %v281
        %v345 = vpop.f32.mrf.mxu0
        %v346 = vadd.f32 0.0, %v345
        %347 = vmatmul.f32.gmra.mxu0 %v284
        %v348 = vpop.f32.mrf.mxu0
        %v349 = vadd.f32 0.0, %v348
        %350 = vmatmul.f32.gmra.mxu0 %v287
        %v351 = vpop.f32.mrf.mxu0
        %v352 = vadd.f32 0.0, %v351
        %353 = vmatmul.f32.gmra.mxu0 %v290
        %v354 = vpop.f32.mrf.mxu0
        %v355 = vadd.f32 0.0, %v354
        %356 = vmatmul.f32.gmra.mxu0 %v293
        %v357 = vpop.f32.mrf.mxu0
        %v358 = vadd.f32 0.0, %v357
        %359 = vmatmul.f32.gmra.mxu0 %v296
        %v360 = vpop.f32.mrf.mxu0
        %v361 = vadd.f32 0.0, %v360
        %362 = vmatmul.f32.gmra.mxu0 %v299
        %v363 = vpop.f32.mrf.mxu0
        %v364 = vadd.f32 0.0, %v363
        %365 = vmatmul.f32.gmra.mxu0 %v302
        %v366 = vpop.f32.mrf.mxu0
        %v367 = vadd.f32 0.0, %v366
        %368 = vmatmul.f32.gmra.mxu0 %v305
        %v369 = vpop.f32.mrf.mxu0
        %v370 = vadd.f32 0.0, %v369
        %371 = vmatmul.f32.gmra.mxu0 %v308
        %v372 = vpop.f32.mrf.mxu0
        %v373 = vadd.f32 0.0, %v372
        %374 = vmatmul.f32.gmra.mxu0 %v311
        %v375 = vpop.f32.mrf.mxu0
        %v376 = vadd.f32 0.0, %v375
        %377 = vmatmul.f32.gmra.mxu0 %v314
        %v378 = vpop.f32.mrf.mxu0
        %v379 = vadd.f32 0.0, %v378
        %380 = vmatmul.f32.gmra.mxu0 %v317
        %v381 = vpop.f32.mrf.mxu0
        %v382 = vadd.f32 0.0, %v381
        %383 = vmatmul.f32.gmra.mxu0 %v320
        %v384 = vpop.f32.mrf.mxu0
        %v385 = vadd.f32 0.0, %v384
        %386 = vmatmul.f32.gmra.mxu0 %v323
        %v387 = vpop.f32.mrf.mxu0
        %v388 = vadd.f32 0.0, %v387
        %389 = vmatmul.f32.gmra.mxu0 %v326
        %v390 = vpop.f32.mrf.mxu0
        %v391 = vadd.f32 0.0, %v390
        %392 = vdwg.mxu0
        %v393 = vld [vmem:[%s253] sm:$0xff]
        %v394 = vld [vmem:[%s253 + $0x8] sm:$0xff]
        %v395 = vld [vmem:[%s253 + $0x10] sm:$0xff]
        %v396 = vld [vmem:[%s253 + $0x18] sm:$0xff]
        %v397 = vld [vmem:[%s253 + $0x20] sm:$0xff]
        %v398 = vld [vmem:[%s253 + $0x28] sm:$0xff]
        %v399 = vld [vmem:[%s253 + $0x30] sm:$0xff]
        %v400 = vld [vmem:[%s253 + $0x38] sm:$0xff]
        %v401 = vld [vmem:[%s253 + $0x40] sm:$0xff]
        %v402 = vld [vmem:[%s253 + $0x48] sm:$0xff]
        %v403 = vld [vmem:[%s253 + $0x50] sm:$0xff]
        %v404 = vld [vmem:[%s253 + $0x58] sm:$0xff]
        %v405 = vld [vmem:[%s253 + $0x60] sm:$0xff]
        %v406 = vld [vmem:[%s253 + $0x68] sm:$0xff]
        %v407 = vld [vmem:[%s253 + $0x70] sm:$0xff]
        %v408 = vld [vmem:[%s253 + $0x78] sm:$0xff]
        %v409 = vld [vmem:[%s3] sm:$0xff]
        %v410 = vld [vmem:[%s3 + $0x8] sm:$0xff]
        %v411 = vld [vmem:[%s3 + $0x10] sm:$0xff]
        %v412 = vld [vmem:[%s3 + $0x18] sm:$0xff]
        %v414 = vsel %vm279, %v393, 0
        %v417 = vsel %vm279, %v394, 0
        %v420 = vsel %vm279, %v395, 0
        %v423 = vsel %vm279, %v396, 0
        %v426 = vsel %vm279, %v397, 0
        %v429 = vsel %vm279, %v398, 0
        %v432 = vsel %vm279, %v399, 0
        %v435 = vsel %vm279, %v400, 0
        %v438 = vsel %vm279, %v401, 0
        %v441 = vsel %vm279, %v402, 0
        %v444 = vsel %vm279, %v403, 0
        %v447 = vsel %vm279, %v404, 0
        %v450 = vsel %vm279, %v405, 0
        %v453 = vsel %vm279, %v406, 0
        %v456 = vsel %vm279, %v407, 0
        %v459 = vsel %vm279, %v408, 0
        %461 = vmatpush.msra.mxu0 0.0
        %462 = vmatpush.msra.mxu0 0.0
        %463 = vmatpush.msra.mxu0 0.0
        %464 = vmatpush.msra.mxu0 0.0
        %465 = vmatpush.msra.mxu0 0.0
        %466 = vmatpush.msra.mxu0 0.0
        %467 = vmatpush.msra.mxu0 0.0
        %468 = vmatpush.msra.mxu0 0.0
        %469 = vmatpush.msra.mxu0 0.0
        %470 = vmatpush.msra.mxu0 0.0
        %471 = vmatpush.msra.mxu0 0.0
        %472 = vmatpush.msra.mxu0 0.0
        %473 = vmatpush.msra.mxu0 %v412
        %474 = vmatpush.msra.mxu0 %v411
        %475 = vmatpush.msra.mxu0 %v410
        %476 = vmatpush.msra.mxu0 %v409
        %477 = vmatmul.f32.gmra.mxu0 %v414
        %v478 = vpop.f32.mrf.mxu0
        %v479 = vadd.f32 0.0, %v478
        %480 = vmatmul.f32.gmra.mxu0 %v417
        %v481 = vpop.f32.mrf.mxu0
        %v482 = vadd.f32 0.0, %v481
        %483 = vmatmul.f32.gmra.mxu0 %v420
        %v484 = vpop.f32.mrf.mxu0
        %v485 = vadd.f32 0.0, %v484
        %486 = vmatmul.f32.gmra.mxu0 %v423
        %v487 = vpop.f32.mrf.mxu0
        %v488 = vadd.f32 0.0, %v487
        %489 = vmatmul.f32.gmra.mxu0 %v426
        %v490 = vpop.f32.mrf.mxu0
        %v491 = vadd.f32 0.0, %v490
        %492 = vmatmul.f32.gmra.mxu0 %v429
        %v493 = vpop.f32.mrf.mxu0
        %v494 = vadd.f32 0.0, %v493
        %495 = vmatmul.f32.gmra.mxu0 %v432
        %v496 = vpop.f32.mrf.mxu0
        %v497 = vadd.f32 0.0, %v496
        %498 = vmatmul.f32.gmra.mxu0 %v435
        %v499 = vpop.f32.mrf.mxu0
        %v500 = vadd.f32 0.0, %v499
        %501 = vmatmul.f32.gmra.mxu0 %v438
        %v502 = vpop.f32.mrf.mxu0
        %v503 = vadd.f32 0.0, %v502
        %504 = vmatmul.f32.gmra.mxu0 %v441
        %v505 = vpop.f32.mrf.mxu0
        %v506 = vadd.f32 0.0, %v505
        %507 = vmatmul.f32.gmra.mxu0 %v444
        %v508 = vpop.f32.mrf.mxu0
        %v509 = vadd.f32 0.0, %v508
        %510 = vmatmul.f32.gmra.mxu0 %v447
        %v511 = vpop.f32.mrf.mxu0
        %v512 = vadd.f32 0.0, %v511
        %513 = vmatmul.f32.gmra.mxu0 %v450
        %v514 = vpop.f32.mrf.mxu0
        %v515 = vadd.f32 0.0, %v514
        %516 = vmatmul.f32.gmra.mxu0 %v453
        %v517 = vpop.f32.mrf.mxu0
        %v518 = vadd.f32 0.0, %v517
        %519 = vmatmul.f32.gmra.mxu0 %v456
        %v520 = vpop.f32.mrf.mxu0
        %v521 = vadd.f32 0.0, %v520
        %522 = vmatmul.f32.gmra.mxu0 %v459
        %v523 = vpop.f32.mrf.mxu0
        %v524 = vadd.f32 0.0, %v523
        %525 = vdwg.mxu0
        %v526 = vmul.f32 %v346, %v479
        %v527 = vmul.f32 %v349, %v482
        %v528 = vmul.f32 %v352, %v485
        %v529 = vmul.f32 %v355, %v488
        %v530 = vmul.f32 %v358, %v491
        %v531 = vmul.f32 %v361, %v494
        %v532 = vmul.f32 %v364, %v497
        %v533 = vmul.f32 %v367, %v500
        %v534 = vmul.f32 %v370, %v503
        %v535 = vmul.f32 %v373, %v506
        %v536 = vmul.f32 %v376, %v509
        %v537 = vmul.f32 %v379, %v512
        %v538 = vmul.f32 %v382, %v515
        %v539 = vmul.f32 %v385, %v518
        %v540 = vmul.f32 %v388, %v521
        %v541 = vmul.f32 %v391, %v524
        %vm542 = vcmask 130048
        %v543 = vsel %vm542, %v526, 0.0
        %544 = vadd.xlane.f32.xlu0 %v543
        %v545 = vpop.xlane.xlu0 %544
        %v546 = vsel %vm542, %v527, 0.0
        %547 = vadd.xlane.f32.xlu0 %v546
        %v548 = vpop.xlane.xlu0 %547
        %v549 = vsel %vm542, %v528, 0.0
        %550 = vadd.xlane.f32.xlu0 %v549
        %v551 = vpop.xlane.xlu0 %550
        %v552 = vsel %vm542, %v529, 0.0
        %553 = vadd.xlane.f32.xlu0 %v552
        %v554 = vpop.xlane.xlu0 %553
        %v555 = vsel %vm542, %v530, 0.0
        %556 = vadd.xlane.f32.xlu0 %v555
        %v557 = vpop.xlane.xlu0 %556
        %v558 = vsel %vm542, %v531, 0.0
        %559 = vadd.xlane.f32.xlu0 %v558
        %v560 = vpop.xlane.xlu0 %559
        %v561 = vsel %vm542, %v532, 0.0
        %562 = vadd.xlane.f32.xlu0 %v561
        %v563 = vpop.xlane.xlu0 %562
        %v564 = vsel %vm542, %v533, 0.0
        %565 = vadd.xlane.f32.xlu0 %v564
        %v566 = vpop.xlane.xlu0 %565
        %v567 = vsel %vm542, %v534, 0.0
        %568 = vadd.xlane.f32.xlu0 %v567
        %v569 = vpop.xlane.xlu0 %568
        %v570 = vsel %vm542, %v535, 0.0
        %571 = vadd.xlane.f32.xlu0 %v570
        %v572 = vpop.xlane.xlu0 %571
        %v573 = vsel %vm542, %v536, 0.0
        %574 = vadd.xlane.f32.xlu0 %v573
        %v575 = vpop.xlane.xlu0 %574
        %v576 = vsel %vm542, %v537, 0.0
        %577 = vadd.xlane.f32.xlu0 %v576
        %v578 = vpop.xlane.xlu0 %577
        %v579 = vsel %vm542, %v538, 0.0
        %580 = vadd.xlane.f32.xlu0 %v579
        %v581 = vpop.xlane.xlu0 %580
        %v582 = vsel %vm542, %v539, 0.0
        %583 = vadd.xlane.f32.xlu0 %v582
        %v584 = vpop.xlane.xlu0 %583
        %v585 = vsel %vm542, %v540, 0.0
        %586 = vadd.xlane.f32.xlu0 %v585
        %v587 = vpop.xlane.xlu0 %586
        %v588 = vsel %vm542, %v541, 0.0
        %589 = vadd.xlane.f32.xlu0 %v588
        %v590 = vpop.xlane.xlu0 %589
        %v607 = vlaneseq
        %v608 = vand.u32 %v607, 127
        %v609 = vperm.slane %v545, %v608
        %v610 = vadd.s32 %v608, 4294967288
        %v611 = vperm.slane %v548, %v610
        %vm612 = vcmask 130112
        %v613 = vsel %vm612, %v611, %v609
        %v614 = vadd.s32 %v608, 4294967280
        %v615 = vperm.slane %v551, %v614
        %vm616 = vcmask 195712
        %v617 = vsel %vm616, %v615, %v613
        %v618 = vadd.s32 %v608, 4294967272
        %v619 = vperm.slane %v554, %v618
        %vm620 = vcmask 261312
        %v621 = vsel %vm620, %v619, %v617
        %v622 = vadd.s32 %v608, 4294967264
        %v623 = vperm.slane %v557, %v622
        %vm624 = vcmask 326912
        %v625 = vsel %vm624, %v623, %v621
        %v626 = vadd.s32 %v608, 4294967256
        %v627 = vperm.slane %v560, %v626
        %vm628 = vcmask 392512
        %v629 = vsel %vm628, %v627, %v625
        %v630 = vadd.s32 %v608, 4294967248
        %v631 = vperm.slane %v563, %v630
        %vm632 = vcmask 458112
        %v633 = vsel %vm632, %v631, %v629
        %v634 = vadd.s32 %v608, 4294967240
        %v635 = vperm.slane %v566, %v634
        %vm636 = vcmask 523712
        %v637 = vsel %vm636, %v635, %v633
        %v638 = vadd.s32 %v608, 4294967232
        %v639 = vperm.slane %v569, %v638
        %vm640 = vcmask 589312
        %v641 = vsel %vm640, %v639, %v637
        %v642 = vadd.s32 %v608, 4294967224
        %v643 = vperm.slane %v572, %v642
        %vm644 = vcmask 654912
        %v645 = vsel %vm644, %v643, %v641
        %v646 = vadd.s32 %v608, 4294967216
        %v647 = vperm.slane %v575, %v646
        %vm648 = vcmask 720512
        %v649 = vsel %vm648, %v647, %v645
        %v650 = vadd.s32 %v608, 4294967208
        %v651 = vperm.slane %v578, %v650
        %vm652 = vcmask 786112
        %v653 = vsel %vm652, %v651, %v649
        %v654 = vadd.s32 %v608, 4294967200
        %v655 = vperm.slane %v581, %v654
        %vm656 = vcmask 851712
        %v657 = vsel %vm656, %v655, %v653
        %v658 = vadd.s32 %v608, 4294967192
        %v659 = vperm.slane %v584, %v658
        %vm660 = vcmask 917312
        %v661 = vsel %vm660, %v659, %v657
        %v662 = vadd.s32 %v608, 4294967184
        %v663 = vperm.slane %v587, %v662
        %vm664 = vcmask 982912
        %v665 = vsel %vm664, %v663, %v661
        %v666 = vadd.s32 %v608, 4294967176
        %v667 = vperm.slane %v590, %v666
        %vm668 = vcmask 1048512
        %v669 = vsel %vm668, %v667, %v665
        %671 = vst [vmem:[%s230] sm:$0x1] %v669
        %s672 = sand.u32 %s120, 1
        %s673 = scalar_lea.sflag [#allocation3], %s672
        %s674 = sand.u32 %s120, 1
        %s675 = scalar_lea.vmem [#allocation2], %s674
        // Predicated region
        $region37: #{tpu_custom_call.1} parent=35 // pred_check
          %p676 = pneg %p130
        $region38: #{tpu_custom_call.1} parent=35 // pred_check_branch
          %678 = sbr.rel (%p676) target = $region40
        $region39: #{tpu_custom_call.1} parent=35 // pred_region
          %680 = vsyncadd %s673, 0
          %s681 = scalar_lea.hbm %s4, %s18
          %s683 = sshll.u32 %s675, 4
          %s684 = int_to_ptr.vmem [resolvable:$true] %s683
          %s685 = sshll.u32 %s681, 4
          %s686 = int_to_ptr.hbm [resolvable:$true] %s685
          %688 = dma.vmem_to_hbm [thread:$0]  %s684, 16, %s686, %s673
        $region40: #{tpu_custom_call.1} parent=35 // pred_fallthru
          _
      $region36: #{tpu_custom_call.1} parent=5 // pred_fallthru
        _
      %p689 = scmp.le.s32.totalorder 2, %s13
      // Predicated region
      $region41: #{tpu_custom_call.1} parent=5 // pred_check
        %p690 = pneg %p689
      $region42: #{tpu_custom_call.1} parent=5 // pred_check_branch
        %692 = sbr.rel (%p690) target = $region44
      $region43: #{tpu_custom_call.1} parent=5 // pred_region
        %s693 = ssub.s32 %s13, 2
        // Predicated region
        $region45: #{tpu_custom_call.1} parent=43 // pred_check
          %p694 = pneg %p136
        $region46: #{tpu_custom_call.1} parent=43 // pred_check_branch
          %696 = sbr.rel (%p694) target = $region48
        $region47: #{tpu_custom_call.1} parent=43 // pred_region
          %s697 = sand.u32 %s121, 1
          %s698 = scalar_lea.sflag [#allocation3], %s697
          %s699 = sand.u32 %s121, 1
          %s700 = scalar_lea.vmem [#allocation2], %s699
          %702 = dma.done %s698, 16
        $region48: #{tpu_custom_call.1} parent=43 // pred_fallthru
          _
      $region44: #{tpu_custom_call.1} parent=5 // pred_fallthru
        _
    $region6: #{tpu_custom_call.1} parent=1 // loop_footer
      %s17 = sadd.s32 1, %s13
    $region7: #{tpu_custom_call.1} parent=1 // loop_footer_branch
      %12 = sbr.rel target = $region3
    $region8: #{tpu_custom_call.1} parent=1 // loop_exit
      _
    %703 = vsyncpa [#allocation3], 1
    %s704 = scalar_lea.sflag [#allocation3], 1
    %705 = vsyncpa %s704, 1

</llo_original>
